<compile_context>
chip_gen: v7x
topology: tpu7x:2x2x1
jax: 0.10.0
libtpu: 0.0.40
codegen_flags: <defaults>
</compile_context>

<pallas_src>
import jax
import jax.numpy as jnp
from jax.experimental import pallas as pl
from jax.experimental.pallas import tpu as pltpu

# ---- problem sizes (small, consistent with the module's forward) ----
B = 2          # batch
B_PAD = 8      # sublane-padded batch used inside the kernel
N_KP = 26      # number of keypoints, each 2-D
N_PARAM = 11   # number of (parsec-like) parameters
N_PTS = 64     # points produced by modelB.sample, each 2-D
HA = 64        # modelA hidden
HB = 128       # modelB hidden

LANES = 128                      # lane width of the packed slab / activation
F_IN = 4 * N_KP + N_PARAM        # 115 = modelA input features
CONST_LANE = 127                 # activation lane holding constant 1.0
H1_CONST_LANE = HA               # h1 lane forced to 1.0 (carries bA2)

# ---- static row offsets inside the packed weight slab (all 128-row blocks) ----
OFF_WA1 = 0       # modelA layer-1 weights (+ bA1 via const lane, + h1-const column)
OFF_WA2 = 128     # modelA layer-2 weights (+ bA2 via h1 const lane)
OFF_WB1P = 256    # modelB layer-1 "expand-folded" param rows
OFF_WB1K = 384    # modelB layer-1 keypoint rows (+ bB1 via const lane)
OFF_WB2 = 512     # modelB layer-2 weights
OFF_BB2 = 640     # modelB layer-2 bias (1 row used)
SLAB_ROWS = 648


def ae_ab_kernel(x_ref, w_ref, out_ref):
    f32 = jnp.float32
    x = x_ref[...]                                                   # (8, 128)

    # ---- modelA: 2-layer MLP over cat(src_kp, tgt_kp, src_param) ----
    # bA1 folded into row CONST_LANE of the WA1 block; that row also pins
    # h1 lane 64 to 1.0 so bA2 can ride in row 64 of the WA2 block.
    h1 = jnp.maximum(
        jnp.dot(x, w_ref[OFF_WA1:OFF_WA1 + 128, :], preferred_element_type=f32),
        0.0)                                                         # (8,128)
    par = jnp.dot(h1, w_ref[OFF_WA2:OFF_WA2 + 128, :],
                  preferred_element_type=f32)                        # (8,128), lanes 11.. are 0

    # ---- modelB.sample over condition = cat(expand(param,2), tgt_kp) ----
    # expand(-1,-1,2) + cat are folded into the packed WB1 blocks; bB1 rides
    # on the activation's constant lane inside the WB1K block.
    # TODO(synk): modelB is a CVAE in the original repo; sample() draws a latent z.
    # A deterministic zero latent is used here (decoder-only path).
    h2 = jnp.maximum(
        jnp.dot(par, w_ref[OFF_WB1P:OFF_WB1P + 128, :], preferred_element_type=f32)
        + jnp.dot(x, w_ref[OFF_WB1K:OFF_WB1K + 128, :], preferred_element_type=f32),
        0.0)                                                         # (8,128)

    pts = (jnp.dot(h2, w_ref[OFF_WB2:OFF_WB2 + 128, :], preferred_element_type=f32)
           + w_ref[OFF_BB2:OFF_BB2 + 1, :])                          # (8,128)

    # single lane-dense output: [points | padded params]
    out_ref[:, 0:LANES] = pts
    out_ref[:, LANES:2 * LANES] = par


def make_params(key):
    ks = jax.random.split(key, 8)
    s = 0.05
    p = {}
    p["WA1"] = s * jax.random.normal(ks[0], (F_IN, HA), jnp.float32)
    p["bA1"] = s * jax.random.normal(ks[1], (1, HA), jnp.float32)
    p["WA2"] = s * jax.random.normal(ks[2], (HA, N_PARAM), jnp.float32)
    p["bA2"] = s * jax.random.normal(ks[3], (1, N_PARAM), jnp.float32)
    p["WB1"] = s * jax.random.normal(ks[4], (2 * (N_PARAM + N_KP), HB), jnp.float32)
    p["bB1"] = s * jax.random.normal(ks[5], (1, HB), jnp.float32)
    p["WB2"] = s * jax.random.normal(ks[6], (HB, N_PTS * 2), jnp.float32)
    p["bB2"] = s * jax.random.normal(ks[7], (1, N_PTS * 2), jnp.float32)
    return p


def pack_weights(p):
    """Pack all weights/biases into one lane-dense (SLAB_ROWS, 128) f32 slab."""
    slab = jnp.zeros((SLAB_ROWS, LANES), jnp.float32)

    # modelA layer 1: rows 0..114 = WA1; constant-lane row carries bA1 and a
    # 1.0 in column HA so that h1 lane 64 becomes a constant 1.0 after ReLU.
    slab = slab.at[OFF_WA1:OFF_WA1 + F_IN, :HA].set(p["WA1"])
    slab = slab.at[OFF_WA1 + CONST_LANE, :HA].set(p["bA1"][0])
    slab = slab.at[OFF_WA1 + CONST_LANE, H1_CONST_LANE].set(1.0)

    # modelA layer 2: rows 0..63 = WA2; row 64 = bA2 (via h1 constant lane).
    slab = slab.at[OFF_WA2:OFF_WA2 + HA, :N_PARAM].set(p["WA2"])
    slab = slab.at[OFF_WA2 + H1_CONST_LANE, :N_PARAM].set(p["bA2"][0])

    # fold expand(-1,-1,2) of target_param_pred into WB1:
    # condition flat layout = [p0,p0,p1,p1,...,p10,p10, kp_flat...]
    WB1 = p["WB1"]
    wb1_param = WB1[:2 * N_PARAM]
    wb1p_eff = wb1_param[0::2] + wb1_param[1::2]          # (N_PARAM, HB)
    wb1k = WB1[2 * N_PARAM:]                              # (2*N_KP, HB)
    slab = slab.at[OFF_WB1P:OFF_WB1P + N_PARAM, :].set(wb1p_eff)
    # keypoint rows aligned with tgt_kp lanes [52:104) of the packed activation;
    # bB1 rides on the activation's constant lane (127).
    slab = slab.at[OFF_WB1K + 2 * N_KP:OFF_WB1K + 4 * N_KP, :].set(wb1k)
    slab = slab.at[OFF_WB1K + CONST_LANE, :].set(p["bB1"][0])

    # modelB layer 2
    slab = slab.at[OFF_WB2:OFF_WB2 + HB, :].set(p["WB2"])
    slab = slab.at[OFF_BB2, :].set(p["bB2"][0])
    return slab


def ae_ab_forward(source_keypoint, target_keypoint, source_param, w_slab):
    """source_keypoint (B,N_KP,2), target_keypoint (B,N_KP,2), source_param (B,N_PARAM,1)."""
    src_kp = source_keypoint.reshape(B, 2 * N_KP)
    tgt_kp = target_keypoint.reshape(B, 2 * N_KP)
    src_pr = source_param.reshape(B, N_PARAM)
    x = jnp.concatenate([src_kp, tgt_kp, src_pr], axis=1)           # (B, 115)
    # pad lanes to 128 and sublanes (batch) to 8 -> one full (8,128) vreg tile
    x = jnp.pad(x, ((0, B_PAD - B), (0, LANES - F_IN)))
    x = x.at[:, CONST_LANE].set(1.0)                                 # constant-1 lane

    out = pl.pallas_call(
        ae_ab_kernel,
        out_shape=jax.ShapeDtypeStruct((B_PAD, 2 * LANES), jnp.float32),
        in_specs=[pl.BlockSpec(memory_space=pltpu.MemorySpace.VMEM),
                  pl.BlockSpec(memory_space=pltpu.MemorySpace.VMEM)],
        out_specs=pl.BlockSpec(memory_space=pltpu.MemorySpace.VMEM),
    )(x, w_slab)

    # glue: slice the packed output, expand(-1,-1,2), reshape to point-last layout
    param = out[:B, LANES:LANES + N_PARAM]                           # (B, N_PARAM)
    pts = out[:B, :N_PTS * 2]                                        # (B, N_PTS*2)
    target_param_pred = jnp.broadcast_to(param[:, :, None], (B, N_PARAM, 2))
    target_point_pred = pts.reshape(B, N_PTS, 2)
    return target_param_pred, target_point_pred


def reference_forward(source_keypoint, target_keypoint, source_param, params):
    """Pure-JAX reference mirroring the PyTorch forward (explicit cat/expand)."""
    src_kp = source_keypoint.reshape(B, -1)
    tgt_kp = target_keypoint.reshape(B, -1)
    src_pr = source_param.reshape(B, -1)
    xA = jnp.concatenate([src_kp, tgt_kp, src_pr], axis=1)
    h1 = jnp.maximum(xA @ params["WA1"] + params["bA1"], 0.0)
    param = h1 @ params["WA2"] + params["bA2"]                      # (B, N_PARAM)
    target_param_pred = jnp.broadcast_to(param[:, :, None], (B, N_PARAM, 2))
    condition = jnp.concatenate([target_param_pred, target_keypoint], axis=1)  # (B, 37, 2)
    cond_flat = condition.reshape(B, -1)
    h2 = jnp.maximum(cond_flat @ params["WB1"] + params["bB1"], 0.0)
    pts = h2 @ params["WB2"] + params["bB2"]
    return target_param_pred, pts.reshape(B, N_PTS, 2)


if __name__ == "__main__":
    key = jax.random.PRNGKey(0)
    k_in, k_par = jax.random.split(key)
    ki = jax.random.split(k_in, 3)
    source_keypoint = jax.random.normal(ki[0], (B, N_KP, 2), jnp.float32)
    target_keypoint = jax.random.normal(ki[1], (B, N_KP, 2), jnp.float32)
    source_param = jax.random.normal(ki[2], (B, N_PARAM, 1), jnp.float32)
    params = make_params(k_par)
    w_slab = pack_weights(params)

    fwd = jax.jit(ae_ab_forward)
    out_param, out_pts = fwd(source_keypoint, target_keypoint, source_param, w_slab)
    jax.block_until_ready((out_param, out_pts))

    ref_param, ref_pts = reference_forward(source_keypoint, target_keypoint,
                                           source_param, params)
    assert out_param.shape == (B, N_PARAM, 2) and out_pts.shape == (B, N_PTS, 2)
    assert jnp.allclose(out_param, ref_param, atol=1e-5, rtol=1e-5)
    assert jnp.allclose(out_pts, ref_pts, atol=1e-5, rtol=1e-5)
    print("KERNEL_OK")
</pallas_src>

<mosaic_0001>
module attributes {stable_mosaic.version = 11 : i64} {
  func.func @ae_ab_kernel(%arg0: memref<8x128xf32, #tpu.memory_space<vmem>>, %arg1: memref<648x128xf32, #tpu.memory_space<vmem>>, %arg2: memref<8x256xf32, #tpu.memory_space<vmem>>) attributes {dimension_semantics = [], scalar_prefetch = 0 : i64, scratch_operands = 0 : i64, tpu.core_type = #tpu.core_type<tc>} {
    %c0 = arith.constant 0 : index
    %c0_0 = arith.constant 0 : index
    %0 = vector.load %arg0[%c0, %c0_0] : memref<8x128xf32, #tpu.memory_space<vmem>>, vector<8x128xf32>
    %c0_1 = arith.constant 0 : index
    %c0_2 = arith.constant 0 : index
    %1 = vector.load %arg1[%c0_1, %c0_2] : memref<648x128xf32, #tpu.memory_space<vmem>>, vector<128x128xf32>
    %cst = arith.constant dense<0.000000e+00> : vector<8x128xf32>
    %2 = tpu.matmul %0, %1, %cst {dimension_numbers = #tpu.dot_dimension_numbers<[1], [0], [0], [1], [0, 0, 1, 1], [], []>} : vector<8x128xf32>, vector<128x128xf32>, vector<8x128xf32> -> vector<8x128xf32>
    %cst_3 = arith.constant 0.000000e+00 : f32
    %3 = vector.broadcast %cst_3 : f32 to vector<8x128xf32>
    %4 = arith.maximumf %2, %3 : vector<8x128xf32>
    %c128 = arith.constant 128 : index
    %c0_4 = arith.constant 0 : index
    %5 = vector.load %arg1[%c128, %c0_4] : memref<648x128xf32, #tpu.memory_space<vmem>>, vector<128x128xf32>
    %cst_5 = arith.constant dense<0.000000e+00> : vector<8x128xf32>
    %6 = tpu.matmul %4, %5, %cst_5 {dimension_numbers = #tpu.dot_dimension_numbers<[1], [0], [0], [1], [0, 0, 1, 1], [], []>} : vector<8x128xf32>, vector<128x128xf32>, vector<8x128xf32> -> vector<8x128xf32>
    %c256 = arith.constant 256 : index
    %c0_6 = arith.constant 0 : index
    %7 = vector.load %arg1[%c256, %c0_6] : memref<648x128xf32, #tpu.memory_space<vmem>>, vector<128x128xf32>
    %cst_7 = arith.constant dense<0.000000e+00> : vector<8x128xf32>
    %8 = tpu.matmul %6, %7, %cst_7 {dimension_numbers = #tpu.dot_dimension_numbers<[1], [0], [0], [1], [0, 0, 1, 1], [], []>} : vector<8x128xf32>, vector<128x128xf32>, vector<8x128xf32> -> vector<8x128xf32>
    %c384 = arith.constant 384 : index
    %c0_8 = arith.constant 0 : index
    %9 = vector.load %arg1[%c384, %c0_8] : memref<648x128xf32, #tpu.memory_space<vmem>>, vector<128x128xf32>
    %cst_9 = arith.constant dense<0.000000e+00> : vector<8x128xf32>
    %10 = tpu.matmul %0, %9, %cst_9 {dimension_numbers = #tpu.dot_dimension_numbers<[1], [0], [0], [1], [0, 0, 1, 1], [], []>} : vector<8x128xf32>, vector<128x128xf32>, vector<8x128xf32> -> vector<8x128xf32>
    %11 = arith.addf %8, %10 : vector<8x128xf32>
    %cst_10 = arith.constant 0.000000e+00 : f32
    %12 = vector.broadcast %cst_10 : f32 to vector<8x128xf32>
    %13 = arith.maximumf %11, %12 : vector<8x128xf32>
    %c512 = arith.constant 512 : index
    %c0_11 = arith.constant 0 : index
    %14 = vector.load %arg1[%c512, %c0_11] : memref<648x128xf32, #tpu.memory_space<vmem>>, vector<128x128xf32>
    %cst_12 = arith.constant dense<0.000000e+00> : vector<8x128xf32>
    %15 = tpu.matmul %13, %14, %cst_12 {dimension_numbers = #tpu.dot_dimension_numbers<[1], [0], [0], [1], [0, 0, 1, 1], [], []>} : vector<8x128xf32>, vector<128x128xf32>, vector<8x128xf32> -> vector<8x128xf32>
    %c640 = arith.constant 640 : index
    %c0_13 = arith.constant 0 : index
    %16 = vector.load %arg1[%c640, %c0_13] : memref<648x128xf32, #tpu.memory_space<vmem>>, vector<1x128xf32>
    %17 = vector.broadcast %16 : vector<1x128xf32> to vector<8x128xf32>
    %18 = arith.addf %15, %17 : vector<8x128xf32>
    %c0_14 = arith.constant 0 : index
    %c0_15 = arith.constant 0 : index
    %19 = vector.load %arg2[%c0_14, %c0_15] : memref<8x256xf32, #tpu.memory_space<vmem>>, vector<8x128xf32>
    tpu.vector_store %arg2[%c0_14, %c0_15], %18 {strides = array<i32>} : memref<8x256xf32, #tpu.memory_space<vmem>>, vector<8x128xf32>,
    %c0_16 = arith.constant 0 : index
    %c128_17 = arith.constant 128 : index
    %20 = vector.load %arg2[%c0_16, %c128_17] : memref<8x256xf32, #tpu.memory_space<vmem>>, vector<8x128xf32>
    tpu.vector_store %arg2[%c0_16, %c128_17], %6 {strides = array<i32>} : memref<8x256xf32, #tpu.memory_space<vmem>>, vector<8x128xf32>,
    return
  }
}

</mosaic_0001>

<llo_original>
// kernel: ae_ab_forward.1
$region0: #{ae_ab_forward.1}
  #allocation0 [shape = 'u32[]', space=smem, size = 0x4, offset = 0x4, fixed_abs, tag = 'smem constant byte address 0x4 - core index']
  #allocation1 [shape = 'u32[144,128]{1,0:T(1,128)}', space=vmem, size = 0x12000, scoped, tag = 'internal scratch']
  %s0 = inlined_call_operand.vmem [shape: f32[8,128], index: 0, kind: input, shape index: {}]
  %s1 = inlined_call_operand.hbm [shape: f32[648,128], index: 1, kind: input, shape index: {}]
  %s2 = inlined_call_operand.vmem [shape: f32[8,256], index: 2, kind: output, shape index: {}]
  %s3 = sld [smem:[#allocation0]]
  $region22: #{ae_ab_forward.1} parent=0
    _
  %s5 = ssub.s32 1, %s3
  %s6 = scalar_select 0, %s5, %s3
  $region1: #{ae_ab_forward.1} parent=0
    #allocation2 [shape = 'u8[331776]{0}', space=vmem, size = 0x51000, scoped, tag = 'input window, operand 1, single buffered']
    #allocation3 [shape = 's32[1]{0}', space=sflag, size = 0x4, scoped, tag = 'scoped memory for ae_ab_forward.1']
    %7 = vsyncpa [#allocation3], 0
    // Predicated region
    $region2: #{ae_ab_forward.1} parent=1 // pred_check
      _
    $region3: #{ae_ab_forward.1} parent=1 // pred_check_branch
      %9 = sbr.rel (0) target = $region5
    $region4: #{ae_ab_forward.1} parent=1 // pred_region
      _
    $region5: #{ae_ab_forward.1} parent=1 // pred_fallthru
      _
    // Predicated region
    $region6: #{ae_ab_forward.1} parent=1 // pred_check
      _
    $region7: #{ae_ab_forward.1} parent=1 // pred_check_branch
      %11 = sbr.rel (0) target = $region9
    $region8: #{ae_ab_forward.1} parent=1 // pred_region
      %s13 = ssub.s32 10368, 10368
      %14 = vsyncadd [#allocation3], %s13
      %s15 = sshll.u32 [#allocation2], 4
      %s16 = int_to_ptr.vmem [resolvable:$true] %s15
      %21 = dma.hbm_to_vmem [thread:$0]  %s1, 10368, %s16, [#allocation3], 128, 128, 8
    $region9: #{ae_ab_forward.1} parent=1 // pred_fallthru
      _
    // Predicated region
    $region10: #{ae_ab_forward.1} parent=1 // pred_check
      _
    $region11: #{ae_ab_forward.1} parent=1 // pred_check_branch
      %23 = sbr.rel (0) target = $region13
    $region12: #{ae_ab_forward.1} parent=1 // pred_region
      %24 = dma.done [#allocation3], 10368
    $region13: #{ae_ab_forward.1} parent=1 // pred_fallthru
      _
    %v25 = vld [vmem:[%s0] sm:$0xff]
    %v26 = vld [vmem:[#allocation2] sm:$0xff]
    %v27 = vld [vmem:[#allocation2 + $0x8] sm:$0xff]
    %v28 = vld [vmem:[#allocation2 + $0x10] sm:$0xff]
    %v29 = vld [vmem:[#allocation2 + $0x18] sm:$0xff]
    %v30 = vld [vmem:[#allocation2 + $0x20] sm:$0xff]
    %v31 = vld [vmem:[#allocation2 + $0x28] sm:$0xff]
    %v32 = vld [vmem:[#allocation2 + $0x30] sm:$0xff]
    %v33 = vld [vmem:[#allocation2 + $0x38] sm:$0xff]
    %v34 = vld [vmem:[#allocation2 + $0x40] sm:$0xff]
    %v35 = vld [vmem:[#allocation2 + $0x48] sm:$0xff]
    %v36 = vld [vmem:[#allocation2 + $0x50] sm:$0xff]
    %v37 = vld [vmem:[#allocation2 + $0x58] sm:$0xff]
    %v38 = vld [vmem:[#allocation2 + $0x60] sm:$0xff]
    %v39 = vld [vmem:[#allocation2 + $0x68] sm:$0xff]
    %v40 = vld [vmem:[#allocation2 + $0x70] sm:$0xff]
    %v41 = vld [vmem:[#allocation2 + $0x78] sm:$0xff]
    %42 = vmatprep.subr.mxu0 0.0
    %43 = vmatpush1.msra.mxu0 %v26
    %44 = vmatprep.subr.mxu0 0.0
    %45 = vmatpush1.msra.mxu0 %v27
    %46 = vmatprep.subr.mxu0 0.0
    %47 = vmatpush1.msra.mxu0 %v28
    %48 = vmatprep.subr.mxu0 0.0
    %49 = vmatpush1.msra.mxu0 %v29
    %50 = vmatprep.subr.mxu0 0.0
    %51 = vmatpush1.msra.mxu0 %v30
    %52 = vmatprep.subr.mxu0 0.0
    %53 = vmatpush1.msra.mxu0 %v31
    %54 = vmatprep.subr.mxu0 0.0
    %55 = vmatpush1.msra.mxu0 %v32
    %56 = vmatprep.subr.mxu0 0.0
    %57 = vmatpush1.msra.mxu0 %v33
    %58 = vmatprep.subr.mxu0 0.0
    %59 = vmatpush1.msra.mxu0 %v34
    %60 = vmatprep.subr.mxu0 0.0
    %61 = vmatpush1.msra.mxu0 %v35
    %62 = vmatprep.subr.mxu0 0.0
    %63 = vmatpush1.msra.mxu0 %v36
    %64 = vmatprep.subr.mxu0 0.0
    %65 = vmatpush1.msra.mxu0 %v37
    %66 = vmatprep.subr.mxu0 0.0
    %67 = vmatpush1.msra.mxu0 %v38
    %68 = vmatprep.subr.mxu0 0.0
    %69 = vmatpush1.msra.mxu0 %v39
    %70 = vmatprep.subr.mxu0 0.0
    %71 = vmatpush1.msra.mxu0 %v40
    %72 = vmatprep.subr.mxu0 0.0
    %73 = vmatpush1.msra.mxu0 %v41
    %74 = vmatprep.subr.mxu0 0.0
    %75 = vmatpush1.msra.mxu0 0.0
    %76 = vmatprep.subr.mxu0 0.0
    %77 = vmatpush1.msra.mxu0 0.0
    %78 = vmatprep.subr.mxu0 0.0
    %79 = vmatpush1.msra.mxu0 0.0
    %80 = vmatprep.subr.mxu0 0.0
    %81 = vmatpush1.msra.mxu0 0.0
    %82 = vmatprep.subr.mxu0 0.0
    %83 = vmatpush1.msra.mxu0 0.0
    %84 = vmatprep.subr.mxu0 0.0
    %85 = vmatpush1.msra.mxu0 0.0
    %86 = vmatprep.subr.mxu0 0.0
    %87 = vmatpush1.msra.mxu0 0.0
    %88 = vmatprep.subr.mxu0 0.0
    %89 = vmatpush1.msra.mxu0 0.0
    %90 = vmatprep.subr.mxu0 0.0
    %91 = vmatpush1.msra.mxu0 0.0
    %92 = vmatprep.subr.mxu0 0.0
    %93 = vmatpush1.msra.mxu0 0.0
    %94 = vmatprep.subr.mxu0 0.0
    %95 = vmatpush1.msra.mxu0 0.0
    %96 = vmatprep.subr.mxu0 0.0
    %97 = vmatpush1.msra.mxu0 0.0
    %98 = vmatprep.subr.mxu0 0.0
    %99 = vmatpush1.msra.mxu0 0.0
    %100 = vmatprep.subr.mxu0 0.0
    %101 = vmatpush1.msra.mxu0 0.0
    %102 = vmatprep.subr.mxu0 0.0
    %103 = vmatpush1.msra.mxu0 0.0
    %104 = vmatprep.subr.mxu0 0.0
    %105 = vmatpush1.msra.mxu0 0.0
    %106 = vmatprep.mubr.f32.mxu0 0.0
    %107 = vmatmul.mubr.f32.gmra.mrb[0].mxu0 %v25
    %v108 = vpop.f32.mrb[0].mxu0
    %v109 = vadd.f32 0.0, %v108
    %v110 = vpop.f32.mrb[0].mxu0
    %111 = vdwg.mxu0
    %v112 = vmax.f32 %v109, 0.0
    %v113 = vld [vmem:[#allocation2 + $0x80] sm:$0xff]
    %v114 = vld [vmem:[#allocation2 + $0x88] sm:$0xff]
    %v115 = vld [vmem:[#allocation2 + $0x90] sm:$0xff]
    %v116 = vld [vmem:[#allocation2 + $0x98] sm:$0xff]
    %v117 = vld [vmem:[#allocation2 + $0xa0] sm:$0xff]
    %v118 = vld [vmem:[#allocation2 + $0xa8] sm:$0xff]
    %v119 = vld [vmem:[#allocation2 + $0xb0] sm:$0xff]
    %v120 = vld [vmem:[#allocation2 + $0xb8] sm:$0xff]
    %v121 = vld [vmem:[#allocation2 + $0xc0] sm:$0xff]
    %v122 = vld [vmem:[#allocation2 + $0xc8] sm:$0xff]
    %v123 = vld [vmem:[#allocation2 + $0xd0] sm:$0xff]
    %v124 = vld [vmem:[#allocation2 + $0xd8] sm:$0xff]
    %v125 = vld [vmem:[#allocation2 + $0xe0] sm:$0xff]
    %v126 = vld [vmem:[#allocation2 + $0xe8] sm:$0xff]
    %v127 = vld [vmem:[#allocation2 + $0xf0] sm:$0xff]
    %v128 = vld [vmem:[#allocation2 + $0xf8] sm:$0xff]
    %129 = vmatprep.subr.mxu0 0.0
    %130 = vmatpush1.msra.mxu0 %v113
    %131 = vmatprep.subr.mxu0 0.0
    %132 = vmatpush1.msra.mxu0 %v114
    %133 = vmatprep.subr.mxu0 0.0
    %134 = vmatpush1.msra.mxu0 %v115
    %135 = vmatprep.subr.mxu0 0.0
    %136 = vmatpush1.msra.mxu0 %v116
    %137 = vmatprep.subr.mxu0 0.0
    %138 = vmatpush1.msra.mxu0 %v117
    %139 = vmatprep.subr.mxu0 0.0
    %140 = vmatpush1.msra.mxu0 %v118
    %141 = vmatprep.subr.mxu0 0.0
    %142 = vmatpush1.msra.mxu0 %v119
    %143 = vmatprep.subr.mxu0 0.0
    %144 = vmatpush1.msra.mxu0 %v120
    %145 = vmatprep.subr.mxu0 0.0
    %146 = vmatpush1.msra.mxu0 %v121
    %147 = vmatprep.subr.mxu0 0.0
    %148 = vmatpush1.msra.mxu0 %v122
    %149 = vmatprep.subr.mxu0 0.0
    %150 = vmatpush1.msra.mxu0 %v123
    %151 = vmatprep.subr.mxu0 0.0
    %152 = vmatpush1.msra.mxu0 %v124
    %153 = vmatprep.subr.mxu0 0.0
    %154 = vmatpush1.msra.mxu0 %v125
    %155 = vmatprep.subr.mxu0 0.0
    %156 = vmatpush1.msra.mxu0 %v126
    %157 = vmatprep.subr.mxu0 0.0
    %158 = vmatpush1.msra.mxu0 %v127
    %159 = vmatprep.subr.mxu0 0.0
    %160 = vmatpush1.msra.mxu0 %v128
    %161 = vmatprep.subr.mxu0 0.0
    %162 = vmatpush1.msra.mxu0 0.0
    %163 = vmatprep.subr.mxu0 0.0
    %164 = vmatpush1.msra.mxu0 0.0
    %165 = vmatprep.subr.mxu0 0.0
    %166 = vmatpush1.msra.mxu0 0.0
    %167 = vmatprep.subr.mxu0 0.0
    %168 = vmatpush1.msra.mxu0 0.0
    %169 = vmatprep.subr.mxu0 0.0
    %170 = vmatpush1.msra.mxu0 0.0
    %171 = vmatprep.subr.mxu0 0.0
    %172 = vmatpush1.msra.mxu0 0.0
    %173 = vmatprep.subr.mxu0 0.0
    %174 = vmatpush1.msra.mxu0 0.0
    %175 = vmatprep.subr.mxu0 0.0
    %176 = vmatpush1.msra.mxu0 0.0
    %177 = vmatprep.subr.mxu0 0.0
    %178 = vmatpush1.msra.mxu0 0.0
    %179 = vmatprep.subr.mxu0 0.0
    %180 = vmatpush1.msra.mxu0 0.0
    %181 = vmatprep.subr.mxu0 0.0
    %182 = vmatpush1.msra.mxu0 0.0
    %183 = vmatprep.subr.mxu0 0.0
    %184 = vmatpush1.msra.mxu0 0.0
    %185 = vmatprep.subr.mxu0 0.0
    %186 = vmatpush1.msra.mxu0 0.0
    %187 = vmatprep.subr.mxu0 0.0
    %188 = vmatpush1.msra.mxu0 0.0
    %189 = vmatprep.subr.mxu0 0.0
    %190 = vmatpush1.msra.mxu0 0.0
    %191 = vmatprep.subr.mxu0 0.0
    %192 = vmatpush1.msra.mxu0 0.0
    %193 = vmatprep.mubr.f32.mxu0 0.0
    %194 = vmatmul.mubr.f32.gmra.mrb[0].mxu0 %v112
    %v195 = vpop.f32.mrb[0].mxu0
    %v196 = vadd.f32 0.0, %v195
    %v197 = vpop.f32.mrb[0].mxu0
    %198 = vdwg.mxu0
    %v199 = vld [vmem:[#allocation2 + $0x100] sm:$0xff]
    %v200 = vld [vmem:[#allocation2 + $0x108] sm:$0xff]
    %v201 = vld [vmem:[#allocation2 + $0x110] sm:$0xff]
    %v202 = vld [vmem:[#allocation2 + $0x118] sm:$0xff]
    %v203 = vld [vmem:[#allocation2 + $0x120] sm:$0xff]
    %v204 = vld [vmem:[#allocation2 + $0x128] sm:$0xff]
    %v205 = vld [vmem:[#allocation2 + $0x130] sm:$0xff]
    %v206 = vld [vmem:[#allocation2 + $0x138] sm:$0xff]
    %v207 = vld [vmem:[#allocation2 + $0x140] sm:$0xff]
    %v208 = vld [vmem:[#allocation2 + $0x148] sm:$0xff]
    %v209 = vld [vmem:[#allocation2 + $0x150] sm:$0xff]
    %v210 = vld [vmem:[#allocation2 + $0x158] sm:$0xff]
    %v211 = vld [vmem:[#allocation2 + $0x160] sm:$0xff]
    %v212 = vld [vmem:[#allocation2 + $0x168] sm:$0xff]
    %v213 = vld [vmem:[#allocation2 + $0x170] sm:$0xff]
    %v214 = vld [vmem:[#allocation2 + $0x178] sm:$0xff]
    %v215 = vld [vmem:[#allocation2 + $0x180] sm:$0xff]
    %v216 = vld [vmem:[#allocation2 + $0x188] sm:$0xff]
    %v217 = vld [vmem:[#allocation2 + $0x190] sm:$0xff]
    %v218 = vld [vmem:[#allocation2 + $0x198] sm:$0xff]
    %v219 = vld [vmem:[#allocation2 + $0x1a0] sm:$0xff]
    %v220 = vld [vmem:[#allocation2 + $0x1a8] sm:$0xff]
    %v221 = vld [vmem:[#allocation2 + $0x1b0] sm:$0xff]
    %v222 = vld [vmem:[#allocation2 + $0x1b8] sm:$0xff]
    %v223 = vld [vmem:[#allocation2 + $0x1c0] sm:$0xff]
    %v224 = vld [vmem:[#allocation2 + $0x1c8] sm:$0xff]
    %v225 = vld [vmem:[#allocation2 + $0x1d0] sm:$0xff]
    %v226 = vld [vmem:[#allocation2 + $0x1d8] sm:$0xff]
    %v227 = vld [vmem:[#allocation2 + $0x1e0] sm:$0xff]
    %v228 = vld [vmem:[#allocation2 + $0x1e8] sm:$0xff]
    %v229 = vld [vmem:[#allocation2 + $0x1f0] sm:$0xff]
    %v230 = vld [vmem:[#allocation2 + $0x1f8] sm:$0xff]
    %231 = vmatprep.subr.mxu0 0.0
    %232 = vmatpush1.msra.mxu0 %v215
    %233 = vmatprep.subr.mxu0 0.0
    %234 = vmatpush1.msra.mxu0 %v216
    %235 = vmatprep.subr.mxu0 0.0
    %236 = vmatpush1.msra.mxu0 %v217
    %237 = vmatprep.subr.mxu0 0.0
    %238 = vmatpush1.msra.mxu0 %v218
    %239 = vmatprep.subr.mxu0 0.0
    %240 = vmatpush1.msra.mxu0 %v219
    %241 = vmatprep.subr.mxu0 0.0
    %242 = vmatpush1.msra.mxu0 %v220
    %243 = vmatprep.subr.mxu0 0.0
    %244 = vmatpush1.msra.mxu0 %v221
    %245 = vmatprep.subr.mxu0 0.0
    %246 = vmatpush1.msra.mxu0 %v222
    %247 = vmatprep.subr.mxu0 0.0
    %248 = vmatpush1.msra.mxu0 %v223
    %249 = vmatprep.subr.mxu0 0.0
    %250 = vmatpush1.msra.mxu0 %v224
    %251 = vmatprep.subr.mxu0 0.0
    %252 = vmatpush1.msra.mxu0 %v225
    %253 = vmatprep.subr.mxu0 0.0
    %254 = vmatpush1.msra.mxu0 %v226
    %255 = vmatprep.subr.mxu0 0.0
    %256 = vmatpush1.msra.mxu0 %v227
    %257 = vmatprep.subr.mxu0 0.0
    %258 = vmatpush1.msra.mxu0 %v228
    %259 = vmatprep.subr.mxu0 0.0
    %260 = vmatpush1.msra.mxu0 %v229
    %261 = vmatprep.subr.mxu0 0.0
    %262 = vmatpush1.msra.mxu0 %v230
    %263 = vmatprep.subr.mxu0 0.0
    %264 = vmatpush1.msra.mxu0 0.0
    %265 = vmatprep.subr.mxu0 0.0
    %266 = vmatpush1.msra.mxu0 0.0
    %267 = vmatprep.subr.mxu0 0.0
    %268 = vmatpush1.msra.mxu0 0.0
    %269 = vmatprep.subr.mxu0 0.0
    %270 = vmatpush1.msra.mxu0 0.0
    %271 = vmatprep.subr.mxu0 0.0
    %272 = vmatpush1.msra.mxu0 0.0
    %273 = vmatprep.subr.mxu0 0.0
    %274 = vmatpush1.msra.mxu0 0.0
    %275 = vmatprep.subr.mxu0 0.0
    %276 = vmatpush1.msra.mxu0 0.0
    %277 = vmatprep.subr.mxu0 0.0
    %278 = vmatpush1.msra.mxu0 0.0
    %279 = vmatprep.subr.mxu0 0.0
    %280 = vmatpush1.msra.mxu0 0.0
    %281 = vmatprep.subr.mxu0 0.0
    %282 = vmatpush1.msra.mxu0 0.0
    %283 = vmatprep.subr.mxu0 0.0
    %284 = vmatpush1.msra.mxu0 0.0
    %285 = vmatprep.subr.mxu0 0.0
    %286 = vmatpush1.msra.mxu0 0.0
    %287 = vmatprep.subr.mxu0 0.0
    %288 = vmatpush1.msra.mxu0 0.0
    %289 = vmatprep.subr.mxu0 0.0
    %290 = vmatpush1.msra.mxu0 0.0
    %291 = vmatprep.subr.mxu0 0.0
    %292 = vmatpush1.msra.mxu0 0.0
    %293 = vmatprep.subr.mxu0 0.0
    %294 = vmatpush1.msra.mxu0 0.0
    %295 = vmatprep.mubr.f32.mxu0 0.0
    %296 = vmatmul.mubr.f32.gmra.mrb[0].mxu0 %v25
    %v297 = vpop.f32.mrb[0].mxu0
    %v298 = vadd.f32 0.0, %v297
    %v299 = vpop.f32.mrb[0].mxu0
    %300 = vdwg.mxu0
    %301 = vmatprep.subr.mxu0 0.0
    %302 = vmatpush1.msra.mxu0 %v199
    %303 = vmatprep.subr.mxu0 0.0
    %304 = vmatpush1.msra.mxu0 %v200
    %305 = vmatprep.subr.mxu0 0.0
    %306 = vmatpush1.msra.mxu0 %v201
    %307 = vmatprep.subr.mxu0 0.0
    %308 = vmatpush1.msra.mxu0 %v202
    %309 = vmatprep.subr.mxu0 0.0
    %310 = vmatpush1.msra.mxu0 %v203
    %311 = vmatprep.subr.mxu0 0.0
    %312 = vmatpush1.msra.mxu0 %v204
    %313 = vmatprep.subr.mxu0 0.0
    %314 = vmatpush1.msra.mxu0 %v205
    %315 = vmatprep.subr.mxu0 0.0
    %316 = vmatpush1.msra.mxu0 %v206
    %317 = vmatprep.subr.mxu0 0.0
    %318 = vmatpush1.msra.mxu0 %v207
    %319 = vmatprep.subr.mxu0 0.0
    %320 = vmatpush1.msra.mxu0 %v208
    %321 = vmatprep.subr.mxu0 0.0
    %322 = vmatpush1.msra.mxu0 %v209
    %323 = vmatprep.subr.mxu0 0.0
    %324 = vmatpush1.msra.mxu0 %v210
    %325 = vmatprep.subr.mxu0 0.0
    %326 = vmatpush1.msra.mxu0 %v211
    %327 = vmatprep.subr.mxu0 0.0
    %328 = vmatpush1.msra.mxu0 %v212
    %329 = vmatprep.subr.mxu0 0.0
    %330 = vmatpush1.msra.mxu0 %v213
    %331 = vmatprep.subr.mxu0 0.0
    %332 = vmatpush1.msra.mxu0 %v214
    %333 = vmatprep.subr.mxu0 0.0
    %334 = vmatpush1.msra.mxu0 0.0
    %335 = vmatprep.subr.mxu0 0.0
    %336 = vmatpush1.msra.mxu0 0.0
    %337 = vmatprep.subr.mxu0 0.0
    %338 = vmatpush1.msra.mxu0 0.0
    %339 = vmatprep.subr.mxu0 0.0
    %340 = vmatpush1.msra.mxu0 0.0
    %341 = vmatprep.subr.mxu0 0.0
    %342 = vmatpush1.msra.mxu0 0.0
    %343 = vmatprep.subr.mxu0 0.0
    %344 = vmatpush1.msra.mxu0 0.0
    %345 = vmatprep.subr.mxu0 0.0
    %346 = vmatpush1.msra.mxu0 0.0
    %347 = vmatprep.subr.mxu0 0.0
    %348 = vmatpush1.msra.mxu0 0.0
    %349 = vmatprep.subr.mxu0 0.0
    %350 = vmatpush1.msra.mxu0 0.0
    %351 = vmatprep.subr.mxu0 0.0
    %352 = vmatpush1.msra.mxu0 0.0
    %353 = vmatprep.subr.mxu0 0.0
    %354 = vmatpush1.msra.mxu0 0.0
    %355 = vmatprep.subr.mxu0 0.0
    %356 = vmatpush1.msra.mxu0 0.0
    %357 = vmatprep.subr.mxu0 0.0
    %358 = vmatpush1.msra.mxu0 0.0
    %359 = vmatprep.subr.mxu0 0.0
    %360 = vmatpush1.msra.mxu0 0.0
    %361 = vmatprep.subr.mxu0 0.0
    %362 = vmatpush1.msra.mxu0 0.0
    %363 = vmatprep.subr.mxu0 0.0
    %364 = vmatpush1.msra.mxu0 0.0
    %365 = vmatprep.mubr.f32.mxu0 0.0
    %366 = vmatmul.mubr.f32.gmra.mrb[0].mxu0 %v196
    %v367 = vpop.f32.mrb[0].mxu0
    %v368 = vadd.f32 %v298, %v367
    %v369 = vpop.f32.mrb[0].mxu0
    %370 = vdwg.mxu0
    %v371 = vmax.f32 %v368, 0.0
    %v372 = vld [vmem:[#allocation2 + $0x200] sm:$0xff]
    %v373 = vld [vmem:[#allocation2 + $0x208] sm:$0xff]
    %v374 = vld [vmem:[#allocation2 + $0x210] sm:$0xff]
    %v375 = vld [vmem:[#allocation2 + $0x218] sm:$0xff]
    %v376 = vld [vmem:[#allocation2 + $0x220] sm:$0xff]
    %v377 = vld [vmem:[#allocation2 + $0x228] sm:$0xff]
    %v378 = vld [vmem:[#allocation2 + $0x230] sm:$0xff]
    %v379 = vld [vmem:[#allocation2 + $0x238] sm:$0xff]
    %v380 = vld [vmem:[#allocation2 + $0x240] sm:$0xff]
    %v381 = vld [vmem:[#allocation2 + $0x248] sm:$0xff]
    %v382 = vld [vmem:[#allocation2 + $0x250] sm:$0xff]
    %v383 = vld [vmem:[#allocation2 + $0x258] sm:$0xff]
    %v384 = vld [vmem:[#allocation2 + $0x260] sm:$0xff]
    %v385 = vld [vmem:[#allocation2 + $0x268] sm:$0xff]
    %v386 = vld [vmem:[#allocation2 + $0x270] sm:$0xff]
    %v387 = vld [vmem:[#allocation2 + $0x278] sm:$0xff]
    %v388 = vld [vmem:[#allocation2 + $0x280] sm:$0x1]
    %v389 = vlaneseq
    %v390 = vshrl.u32 %v389, 7
    %v391 = vsub.s32 0, %v390
    %v392 = vrot.slane %v388, %v391
    %393 = vmatprep.subr.mxu0 0.0
    %394 = vmatpush1.msra.mxu0 %v372
    %395 = vmatprep.subr.mxu0 0.0
    %396 = vmatpush1.msra.mxu0 %v373
    %397 = vmatprep.subr.mxu0 0.0
    %398 = vmatpush1.msra.mxu0 %v374
    %399 = vmatprep.subr.mxu0 0.0
    %400 = vmatpush1.msra.mxu0 %v375
    %401 = vmatprep.subr.mxu0 0.0
    %402 = vmatpush1.msra.mxu0 %v376
    %403 = vmatprep.subr.mxu0 0.0
    %404 = vmatpush1.msra.mxu0 %v377
    %405 = vmatprep.subr.mxu0 0.0
    %406 = vmatpush1.msra.mxu0 %v378
    %407 = vmatprep.subr.mxu0 0.0
    %408 = vmatpush1.msra.mxu0 %v379
    %409 = vmatprep.subr.mxu0 0.0
    %410 = vmatpush1.msra.mxu0 %v380
    %411 = vmatprep.subr.mxu0 0.0
    %412 = vmatpush1.msra.mxu0 %v381
    %413 = vmatprep.subr.mxu0 0.0
    %414 = vmatpush1.msra.mxu0 %v382
    %415 = vmatprep.subr.mxu0 0.0
    %416 = vmatpush1.msra.mxu0 %v383
    %417 = vmatprep.subr.mxu0 0.0
    %418 = vmatpush1.msra.mxu0 %v384
    %419 = vmatprep.subr.mxu0 0.0
    %420 = vmatpush1.msra.mxu0 %v385
    %421 = vmatprep.subr.mxu0 0.0
    %422 = vmatpush1.msra.mxu0 %v386
    %423 = vmatprep.subr.mxu0 0.0
    %424 = vmatpush1.msra.mxu0 %v387
    %425 = vmatprep.subr.mxu0 0.0
    %426 = vmatpush1.msra.mxu0 0.0
    %427 = vmatprep.subr.mxu0 0.0
    %428 = vmatpush1.msra.mxu0 0.0
    %429 = vmatprep.subr.mxu0 0.0
    %430 = vmatpush1.msra.mxu0 0.0
    %431 = vmatprep.subr.mxu0 0.0
    %432 = vmatpush1.msra.mxu0 0.0
    %433 = vmatprep.subr.mxu0 0.0
    %434 = vmatpush1.msra.mxu0 0.0
    %435 = vmatprep.subr.mxu0 0.0
    %436 = vmatpush1.msra.mxu0 0.0
    %437 = vmatprep.subr.mxu0 0.0
    %438 = vmatpush1.msra.mxu0 0.0
    %439 = vmatprep.subr.mxu0 0.0
    %440 = vmatpush1.msra.mxu0 0.0
    %441 = vmatprep.subr.mxu0 0.0
    %442 = vmatpush1.msra.mxu0 0.0
    %443 = vmatprep.subr.mxu0 0.0
    %444 = vmatpush1.msra.mxu0 0.0
    %445 = vmatprep.subr.mxu0 0.0
    %446 = vmatpush1.msra.mxu0 0.0
    %447 = vmatprep.subr.mxu0 0.0
    %448 = vmatpush1.msra.mxu0 0.0
    %449 = vmatprep.subr.mxu0 0.0
    %450 = vmatpush1.msra.mxu0 0.0
    %451 = vmatprep.subr.mxu0 0.0
    %452 = vmatpush1.msra.mxu0 0.0
    %453 = vmatprep.subr.mxu0 0.0
    %454 = vmatpush1.msra.mxu0 0.0
    %455 = vmatprep.subr.mxu0 0.0
    %456 = vmatpush1.msra.mxu0 0.0
    %457 = vmatprep.mubr.f32.mxu0 0.0
    %458 = vmatmul.mubr.f32.gmra.mrb[0].mxu0 %v371
    %v459 = vpop.f32.mrb[0].mxu0
    %v460 = vadd.f32 %v392, %v459
    %v461 = vpop.f32.mrb[0].mxu0
    %462 = vdwg.mxu0
    %463 = vst [vmem:[%s2] sm:$0xff] %v460
    %464 = vst [vmem:[%s2 + $0x8] sm:$0xff] %v196
    // Predicated region
    $region14: #{ae_ab_forward.1} parent=1 // pred_check
      _
    $region15: #{ae_ab_forward.1} parent=1 // pred_check_branch
      %466 = sbr.rel (0) target = $region17
    $region16: #{ae_ab_forward.1} parent=1 // pred_region
      _
    $region17: #{ae_ab_forward.1} parent=1 // pred_fallthru
      _
    // Predicated region
    $region18: #{ae_ab_forward.1} parent=1 // pred_check
      _
    $region19: #{ae_ab_forward.1} parent=1 // pred_check_branch
      %468 = sbr.rel (0) target = $region21
    $region20: #{ae_ab_forward.1} parent=1 // pred_region
      _
    $region21: #{ae_ab_forward.1} parent=1 // pred_fallthru
      _
    %469 = vsyncpa [#allocation3], 1

</llo_original>
